<compile_context>
chip_gen: v6e
topology: v6e:2x2x1
jax: 0.10.0
libtpu: 0.0.40
codegen_flags: <defaults>
</compile_context>

<pallas_src>
import jax
import jax.numpy as jnp
from jax import lax
from jax.experimental import pallas as pl
from jax.experimental.pallas import tpu as pltpu

BN_EPS = 1e-5  # nn.BatchNorm1d default eps


def _filter_kernel(x_ref, fdft_ref, idft_ref, wr_ref, wi_ref, shift_ref, o_ref):
    """x_ref/o_ref: (tb, L, H).  fdft: (2Fp, L).  idft: (L, 2Fp).
    wr/wi: (Fp, H) = bn_scale*(W.real+1) / bn_scale*W.imag.  shift: (1, H)."""
    fdft = fdft_ref[...]
    idft = idft_ref[...]
    wr = wr_ref[...]
    wi = wi_ref[...]
    shift = shift_ref[...]
    fp = wr.shape[0]
    tb = x_ref.shape[0]

    def one_batch(b, carry):
        x = x_ref[b].astype(jnp.float32)                                 # (L, H)
        # Fused forward DFT: rows [0:Fp) = Re(rfft), rows [Fp:2Fp) = Im(rfft).
        z = jnp.dot(fdft, x, preferred_element_type=jnp.float32)         # (2Fp, H)
        xr = z[:fp]
        xi = z[fp:]
        # Complex multiply by the folded filter (residual + BN scale pre-folded).
        y2 = jnp.concatenate([xr * wr - xi * wi, xr * wi + xi * wr], axis=0)
        # Fused inverse DFT back to the sequence domain.
        y = jnp.dot(idft, y2, preferred_element_type=jnp.float32)        # (L, H)
        o_ref[b] = (y + shift).astype(o_ref.dtype)
        return carry

    lax.fori_loop(0, tb, one_batch, 0, unroll=tb <= 8)


def _dft_matrices(L, Fp):
    """Stacked real matrices implementing rfft / irfft with norm='ortho' along
    axis 0, with the F (=L//2+1) frequency bins zero-padded up to Fp rows/cols."""
    F = L // 2 + 1
    n = jnp.arange(L, dtype=jnp.float32)
    k = jnp.arange(F, dtype=jnp.float32)
    inv_sqrt_l = 1.0 / jnp.sqrt(jnp.float32(L))

    ang = 2.0 * jnp.pi * k[:, None] * n[None, :] / L                      # (F, L)
    cf = jnp.cos(ang) * inv_sqrt_l                                        # Re(rfft)
    sf = -jnp.sin(ang) * inv_sqrt_l                                       # Im(rfft)

    # Hermitian doubling of interior bins; DC (and Nyquist for even L) weight 1.
    c = jnp.full((F,), 2.0, jnp.float32).at[0].set(1.0)
    if L % 2 == 0:
        c = c.at[F - 1].set(1.0)
    ci = jnp.cos(ang).T * (c[None, :] * inv_sqrt_l)                       # (L, F)
    si = -jnp.sin(ang).T * (c[None, :] * inv_sqrt_l)                      # (L, F)

    pad = Fp - F
    cf = jnp.pad(cf, ((0, pad), (0, 0)))
    sf = jnp.pad(sf, ((0, pad), (0, 0)))
    ci = jnp.pad(ci, ((0, 0), (0, pad)))
    si = jnp.pad(si, ((0, 0), (0, pad)))

    fdft = jnp.concatenate([cf, sf], axis=0)                              # (2Fp, L)
    idft = jnp.concatenate([ci, si], axis=1)                              # (L, 2Fp)
    return fdft, idft


def _pick_batch_tile(B, L, H, itemsize, vmem_block_budget=24 << 20):
    """Largest batch tile whose double-buffered x+out blocks fit the VMEM budget,
    preferring >=2 (and even) grid steps so megacore can shard the batch grid."""
    divisors = [d for d in range(1, B + 1) if B % d == 0]
    per_batch = 2 * 2 * L * H * itemsize          # x + out blocks, double-buffered
    fitting = [d for d in divisors if d * per_batch <= vmem_block_budget] or [1]

    def score(d):
        steps = B // d
        return (steps >= 2, steps % 2 == 0, d)

    return max(fitting, key=score)


def filter_layer_forward(x, complex_weight, bn_params, *, batch_tile=None):
    """x: (B, L, H).  complex_weight: (1, L//2+1, H, 2) float32.
    bn_params: (gamma, beta, running_mean, running_var), each (H,).  Eval mode."""
    B, L, H = x.shape
    F = L // 2 + 1
    Fp = ((F + 7) // 8) * 8                       # pad freq bins to a sublane tile

    gamma, beta, mean, var = bn_params
    scale = (gamma / jnp.sqrt(var + BN_EPS)).astype(jnp.float32)          # (H,)
    shift = (beta - mean * scale).astype(jnp.float32)                     # (H,)

    fdft, idft = _dft_matrices(L, Fp)

    wr = complex_weight[0, :, :, 0].astype(jnp.float32)                   # (F, H)
    wi = complex_weight[0, :, :, 1].astype(jnp.float32)                   # (F, H)
    # Fold the residual (W -> W+1; exact for 'ortho') and the BN scale into the
    # filter, then pad the frequency axis with zeros up to Fp.
    wr_f = jnp.pad((wr + 1.0) * scale[None, :], ((0, Fp - F), (0, 0)))    # (Fp, H)
    wi_f = jnp.pad(wi * scale[None, :], ((0, Fp - F), (0, 0)))            # (Fp, H)
    shift2 = shift.reshape(1, H)                                          # (1, H)

    itemsize = jnp.dtype(x.dtype).itemsize
    tb = batch_tile if batch_tile is not None else _pick_batch_tile(B, L, H, itemsize)
    assert B % tb == 0, f"batch_tile {tb} must divide batch {B}"

    # VMEM accounting: double-buffered x/out blocks + (small) invariant blocks.
    blk_bytes = tb * L * H * itemsize
    inv_bytes = 4 * (2 * Fp * L + 2 * Fp * L + 2 * Fp * H + H)
    need = 2 * 2 * blk_bytes + 2 * inv_bytes + (4 << 20)
    vmem_limit = int(min(max(need, 32 << 20), 64 << 20))

    invariant2d = lambda i: (0, 0)

    out = pl.pallas_call(
        _filter_kernel,
        out_shape=jax.ShapeDtypeStruct((B, L, H), x.dtype),
        grid_spec=pltpu.PrefetchScalarGridSpec(
            num_scalar_prefetch=0,
            grid=(B // tb,),
            in_specs=[
                pl.BlockSpec((tb, L, H), lambda i: (i, 0, 0)),   # x slab (tb batches)
                pl.BlockSpec((2 * Fp, L), invariant2d),          # fused forward DFT
                pl.BlockSpec((L, 2 * Fp), invariant2d),          # fused inverse DFT
                pl.BlockSpec((Fp, H), invariant2d),              # folded filter (real)
                pl.BlockSpec((Fp, H), invariant2d),              # folded filter (imag)
                pl.BlockSpec((1, H), invariant2d),               # BN shift
            ],
            out_specs=pl.BlockSpec((tb, L, H), lambda i: (i, 0, 0)),
        ),
        compiler_params=pltpu.CompilerParams(
            dimension_semantics=("parallel",),
            vmem_limit_bytes=vmem_limit),
    )(x, fdft, idft, wr_f, wi_f, shift2)

    return out


def _reference(x, complex_weight, bn_params):
    """Pure-JAX reference (FFT-based), eval-mode semantics."""
    gamma, beta, mean, var = bn_params
    w = complex_weight[0, :, :, 0] + 1j * complex_weight[0, :, :, 1]      # (F, H)
    X = jnp.fft.rfft(x, axis=1, norm="ortho")
    y = jnp.fft.irfft(X * w[None], n=x.shape[1], axis=1, norm="ortho")
    h = y + x
    return (h - mean) / jnp.sqrt(var + BN_EPS) * gamma + beta


if __name__ == "__main__":
    B, L, H = 2, 8, 32
    F = L // 2 + 1

    key = jax.random.PRNGKey(0)
    kx, kw, kg, kb, km, kv = jax.random.split(key, 6)
    x = jax.random.normal(kx, (B, L, H), jnp.float32)
    complex_weight = 0.02 * jax.random.normal(kw, (1, F, H, 2), jnp.float32)
    gamma = 1.0 + 0.1 * jax.random.normal(kg, (H,), jnp.float32)
    beta = 0.1 * jax.random.normal(kb, (H,), jnp.float32)
    mean = 0.05 * jax.random.normal(km, (H,), jnp.float32)
    var = 1.0 + 0.1 * jnp.abs(jax.random.normal(kv, (H,), jnp.float32))
    bn_params = (gamma, beta, mean, var)

    ref = _reference(x, complex_weight, bn_params)

    # Default picker: tb=1, grid of 2 parallel steps.
    out = jax.block_until_ready(filter_layer_forward(x, complex_weight, bn_params))
    assert out.shape == (B, L, H)
    assert bool(jnp.all(jnp.isfinite(out)))
    err = float(jnp.max(jnp.abs(out - ref)))
    assert err < 2e-3, f"max abs error vs FFT reference: {err}"

    # Also exercise the multi-batch-per-block path (in-kernel batch loop).
    out2 = jax.block_until_ready(
        filter_layer_forward(x, complex_weight, bn_params, batch_tile=2))
    err2 = float(jnp.max(jnp.abs(out2 - ref)))
    assert err2 < 2e-3, f"max abs error (batch_tile=2): {err2}"

    print("KERNEL_OK")
</pallas_src>

<mosaic_0001>
module attributes {stable_mosaic.version = 11 : i64} {
  func.func @_filter_kernel(%arg0: i32, %arg1: memref<1x8x32xf32, #tpu.memory_space<vmem>>, %arg2: memref<16x8xf32, #tpu.memory_space<vmem>>, %arg3: memref<8x16xf32, #tpu.memory_space<vmem>>, %arg4: memref<8x32xf32, #tpu.memory_space<vmem>>, %arg5: memref<8x32xf32, #tpu.memory_space<vmem>>, %arg6: memref<1x32xf32, #tpu.memory_space<vmem>>, %arg7: memref<1x8x32xf32, #tpu.memory_space<vmem>>) attributes {dimension_semantics = [#tpu.dimension_semantics<parallel>], iteration_bounds = array<i64: 2>, scalar_prefetch = 0 : i64, scratch_operands = 0 : i64, tpu.core_type = #tpu.core_type<tc>, window_params = [{transform_indices = @transform_0, window_bounds = array<i64: 1, 8, 32>}, {pipeline_mode = #tpu.pipeline_mode<synchronous>, transform_indices = @transform_1, window_bounds = array<i64: 16, 8>}, {pipeline_mode = #tpu.pipeline_mode<synchronous>, transform_indices = @transform_2, window_bounds = array<i64: 8, 16>}, {pipeline_mode = #tpu.pipeline_mode<synchronous>, transform_indices = @transform_3, window_bounds = array<i64: 8, 32>}, {pipeline_mode = #tpu.pipeline_mode<synchronous>, transform_indices = @transform_4, window_bounds = array<i64: 8, 32>}, {pipeline_mode = #tpu.pipeline_mode<synchronous>, transform_indices = @transform_5, window_bounds = array<i64: 1, 32>}, {transform_indices = @transform_6, window_bounds = array<i64: 1, 8, 32>}]} {
    %c0 = arith.constant 0 : index
    %c0_0 = arith.constant 0 : index
    %0 = vector.load %arg2[%c0, %c0_0] : memref<16x8xf32, #tpu.memory_space<vmem>>, vector<16x8xf32>
    %c0_1 = arith.constant 0 : index
    %c0_2 = arith.constant 0 : index
    %1 = vector.load %arg3[%c0_1, %c0_2] : memref<8x16xf32, #tpu.memory_space<vmem>>, vector<8x16xf32>
    %c0_3 = arith.constant 0 : index
    %c0_4 = arith.constant 0 : index
    %2 = vector.load %arg4[%c0_3, %c0_4] : memref<8x32xf32, #tpu.memory_space<vmem>>, vector<8x32xf32>
    %c0_5 = arith.constant 0 : index
    %c0_6 = arith.constant 0 : index
    %3 = vector.load %arg5[%c0_5, %c0_6] : memref<8x32xf32, #tpu.memory_space<vmem>>, vector<8x32xf32>
    %c0_7 = arith.constant 0 : index
    %c0_8 = arith.constant 0 : index
    %4 = vector.load %arg6[%c0_7, %c0_8] : memref<1x32xf32, #tpu.memory_space<vmem>>, vector<1x32xf32>
    %c0_i32 = arith.constant 0 : i32
    %5 = arith.index_cast %c0_i32 : i32 to index
    %c0_9 = arith.constant 0 : index
    %c0_10 = arith.constant 0 : index
    %6 = vector.load %arg1[%5, %c0_9, %c0_10] : memref<1x8x32xf32, #tpu.memory_space<vmem>>, vector<1x8x32xf32>
    %7 = vector.shape_cast %6 : vector<1x8x32xf32> to vector<8x32xf32>
    %cst = arith.constant dense<0.000000e+00> : vector<16x32xf32>
    %8 = tpu.matmul %0, %7, %cst {dimension_numbers = #tpu.dot_dimension_numbers<[1], [0], [0], [1], [0, 0, 1, 1], [], []>} : vector<16x8xf32>, vector<8x32xf32>, vector<16x32xf32> -> vector<16x32xf32>
    %9 = vector.extract_strided_slice %8 {offsets = [0, 0], sizes = [8, 32], strides = [1, 1]} : vector<16x32xf32> to vector<8x32xf32>
    %10 = vector.extract_strided_slice %8 {offsets = [8, 0], sizes = [8, 32], strides = [1, 1]} : vector<16x32xf32> to vector<8x32xf32>
    %11 = arith.mulf %9, %2 : vector<8x32xf32>
    %12 = arith.mulf %10, %3 : vector<8x32xf32>
    %13 = arith.subf %11, %12 : vector<8x32xf32>
    %14 = arith.mulf %9, %3 : vector<8x32xf32>
    %15 = arith.mulf %10, %2 : vector<8x32xf32>
    %16 = arith.addf %14, %15 : vector<8x32xf32>
    %17 = tpu.concatenate %13, %16 in 0 : vector<8x32xf32>, vector<8x32xf32> -> vector<16x32xf32>
    %cst_11 = arith.constant dense<0.000000e+00> : vector<8x32xf32>
    %18 = tpu.matmul %1, %17, %cst_11 {dimension_numbers = #tpu.dot_dimension_numbers<[1], [0], [0], [1], [0, 0, 1, 1], [], []>} : vector<8x16xf32>, vector<16x32xf32>, vector<8x32xf32> -> vector<8x32xf32>
    %19 = vector.broadcast %4 : vector<1x32xf32> to vector<8x32xf32>
    %20 = arith.addf %18, %19 : vector<8x32xf32>
    %21 = arith.index_cast %c0_i32 : i32 to index
    %c0_12 = arith.constant 0 : index
    %c0_13 = arith.constant 0 : index
    %22 = vector.load %arg7[%21, %c0_12, %c0_13] : memref<1x8x32xf32, #tpu.memory_space<vmem>>, vector<1x8x32xf32>
    %23 = vector.shape_cast %22 : vector<1x8x32xf32> to vector<8x32xf32>
    %24 = vector.shape_cast %20 : vector<8x32xf32> to vector<1x8x32xf32>
    tpu.vector_store %arg7[%21, %c0_12, %c0_13], %24 {strides = array<i32>} : memref<1x8x32xf32, #tpu.memory_space<vmem>>, vector<1x8x32xf32>,
    %c1_i32 = arith.constant 1 : i32
    return
  }
  func.func @transform_0(%arg0: i32) -> (i32, i32, i32) {
    %c0_i32 = arith.constant 0 : i32
    %c0_i32_0 = arith.constant 0 : i32
    %c0_i32_1 = arith.constant 0 : i32
    return %arg0, %c0_i32, %c0_i32_0 : i32, i32, i32
  }
  func.func @transform_1(%arg0: i32) -> (i32, i32) {
    %c0_i32 = arith.constant 0 : i32
    %c0_i32_0 = arith.constant 0 : i32
    %c0_i32_1 = arith.constant 0 : i32
    return %c0_i32, %c0_i32_0 : i32, i32
  }
  func.func @transform_2(%arg0: i32) -> (i32, i32) {
    %c0_i32 = arith.constant 0 : i32
    %c0_i32_0 = arith.constant 0 : i32
    %c0_i32_1 = arith.constant 0 : i32
    return %c0_i32, %c0_i32_0 : i32, i32
  }
  func.func @transform_3(%arg0: i32) -> (i32, i32) {
    %c0_i32 = arith.constant 0 : i32
    %c0_i32_0 = arith.constant 0 : i32
    %c0_i32_1 = arith.constant 0 : i32
    return %c0_i32, %c0_i32_0 : i32, i32
  }
  func.func @transform_4(%arg0: i32) -> (i32, i32) {
    %c0_i32 = arith.constant 0 : i32
    %c0_i32_0 = arith.constant 0 : i32
    %c0_i32_1 = arith.constant 0 : i32
    return %c0_i32, %c0_i32_0 : i32, i32
  }
  func.func @transform_5(%arg0: i32) -> (i32, i32) {
    %c0_i32 = arith.constant 0 : i32
    %c0_i32_0 = arith.constant 0 : i32
    %c0_i32_1 = arith.constant 0 : i32
    return %c0_i32, %c0_i32_0 : i32, i32
  }
  func.func @transform_6(%arg0: i32) -> (i32, i32, i32) {
    %c0_i32 = arith.constant 0 : i32
    %c0_i32_0 = arith.constant 0 : i32
    %c0_i32_1 = arith.constant 0 : i32
    return %arg0, %c0_i32, %c0_i32_0 : i32, i32, i32
  }
}

</mosaic_0001>

<llo_original>
// kernel: tpu_custom_call.1
$region0: #{tpu_custom_call.1}
  #allocation0 [shape = 'u32[]', space=smem, size = 0x4, offset = 0x4, fixed_abs, tag = 'smem constant byte address 0x4 - core index']
  #allocation1 [shape = 'u32[144,128]{1,0:T(1,128)}', space=vmem, size = 0x12000, scoped, tag = 'internal scratch']
  %s0 = inlined_call_operand.vmem [shape: f32[2,8,32], index: 0, kind: input, shape index: {}]
  %s1 = inlined_call_operand.vmem [shape: f32[16,8], index: 1, kind: input, shape index: {}]
  %s2 = inlined_call_operand.vmem [shape: f32[8,16], index: 2, kind: input, shape index: {}]
  %s3 = inlined_call_operand.hbm [shape: f32[8,32], index: 3, kind: input, shape index: {}]
  %s4 = inlined_call_operand.hbm [shape: f32[8,32], index: 4, kind: input, shape index: {}]
  %s5 = inlined_call_operand.vmem [shape: f32[1,32], index: 5, kind: input, shape index: {}]
  %s6 = inlined_call_operand.hbm [shape: f32[2,8,32], index: 6, kind: output, shape index: {}]
  %s7 = sld [smem:[#allocation0]]
  $region65: #{tpu_custom_call.1} parent=0
    _
  %s9 = ssub.s32 1, %s7
  %s10 = scalar_select 0, %s9, %s7
  $region1: #{tpu_custom_call.1} parent=0
    #allocation2 [shape = 'u8[4096]{0}', space=vmem, size = 0x1000, scoped, tag = 'input window, operand 3, single buffered']
    #allocation3 [shape = 's32[2]{0}', space=sflag, size = 0x8, scoped, tag = 'scoped memory for tpu_custom_call.1']
    #allocation4 [shape = 's32[2]{0}', space=sflag, size = 0x8, scoped, tag = 'scoped memory for tpu_custom_call.1']
    #allocation5 [shape = 'u8[4096]{0}', space=vmem, size = 0x1000, scoped, tag = 'input window, operand 4, single buffered']
    #allocation6 [shape = 's32[1]{0}', space=sflag, size = 0x4, scoped, tag = 'scoped memory for tpu_custom_call.1']
    #allocation7 [shape = 'u8[8192]{0}', space=vmem, size = 0x2000, scoped, tag = 'output window, operand 0']
    %11 = vsyncpa [#allocation3], 0
    %12 = vsyncpa [#allocation6], 0
    %13 = vsyncpa [#allocation4], 0
    %s14 = scalar_lea.sflag [#allocation4], 1
    %15 = vsyncpa %s14, 0
    loop: start=0, step=1, limit=4
    $region2: #{tpu_custom_call.1} parent=1 // loop_pre_header
      _
    $region3: #{tpu_custom_call.1} parent=1 // loop_header
      %s17 = sphi 0, %s21
      %p18 = scmp.ge.s32.totalorder %s17, 4
      %s27 = sphi 0, %s29
      %s30 = sphi 0, %s27
      %s31 = sphi 0, %s30
      %s47 = sphi 0, %s31
      %s51 = sphi 0, %s51
      %s53 = sphi 0, %s51
      %s54 = sphi 0, %s53
      %s68 = sphi 0, %s54
      %s72 = sphi 0, %s72
      %s74 = sphi 0, %s72
      %s75 = sphi 0, %s74
      %s89 = sphi 0, %s75
      %s93 = sphi 0, %s93
      %s95 = sphi 0, %s93
      %s96 = sphi 0, %s95
      %s110 = sphi 0, %s96
      %s114 = sphi 0, %s114
      %s116 = sphi 0, %s114
      %s117 = sphi 0, %s116
      %s131 = sphi 0, %s117
      %s135 = sphi 0, %s135
      %s137 = sphi 0, %s135
      %s138 = sphi 0, %s137
      %s152 = sphi 0, %s138
      %s158 = sphi 0, %s160
      %s161 = sphi 0, %s158
      %s162 = sphi 0, %s161
      %s178 = sphi 0, %s162
    $region4: #{tpu_custom_call.1} parent=1 // loop_header_branch
      %20 = sbr.rel (%p18) target = $region8
    $region5: #{tpu_custom_call.1} parent=1 // loop_body
      %s22 = ssub.s32 %s17, 1
      %s23 = ssub.s32 %s17, 2
      %s24 = sadd.s32 %s17, 1
      %s25 = ssub.s32 %s17, %s24
      %p26 = scmp.eq.s32.totalorder %s25, 0
      %s28 = sadd.s32 %s27, 1
      %s29 = scalar_select %p26, %s27, %s28
      %p32 = pneg %p26
      %p33 = scmp.eq.s32.totalorder %s17, 1
      %p34 = por %p32, %p33
      %p35 = scmp.ne.s32.totalorder %s27, %s30
      %p36 = scmp.eq.s32.totalorder %s17, 0
      %p37 = por %p35, %p36
      %p38 = scmp.ne.s32.totalorder %s27, %s30
      %p39 = scmp.eq.s32.totalorder %s22, 1
      %p40 = por %p38, %p39
      %p41 = scmp.ne.s32.totalorder %s30, %s31
      %p42 = scmp.eq.s32.totalorder %s22, 0
      %p43 = por %p41, %p42
      %p44 = scmp.ne.s32.totalorder %s30, %s31
      %p45 = scmp.eq.s32.totalorder %s23, 1
      %p46 = por %p44, %p45
      %p48 = scmp.ne.s32.totalorder %s31, %s47
      %p49 = scmp.eq.s32.totalorder %s23, 0
      %p50 = por %p48, %p49
      %s52 = sadd.s32 %s51, 1
      %p55 = scmp.eq.s32.totalorder %s17, 1
      %p56 = scmp.ne.s32.totalorder %s51, %s53
      %p57 = scmp.eq.s32.totalorder %s17, 0
      %p58 = por %p56, %p57
      %p59 = scmp.ne.s32.totalorder %s51, %s53
      %p60 = scmp.eq.s32.totalorder %s22, 1
      %p61 = por %p59, %p60
      %p62 = scmp.ne.s32.totalorder %s53, %s54
      %p63 = scmp.eq.s32.totalorder %s22, 0
      %p64 = por %p62, %p63
      %p65 = scmp.ne.s32.totalorder %s53, %s54
      %p66 = scmp.eq.s32.totalorder %s23, 1
      %p67 = por %p65, %p66
      %p69 = scmp.ne.s32.totalorder %s54, %s68
      %p70 = scmp.eq.s32.totalorder %s23, 0
      %p71 = por %p69, %p70
      %s73 = sadd.s32 %s72, 1
      %p76 = scmp.eq.s32.totalorder %s17, 1
      %p77 = scmp.ne.s32.totalorder %s72, %s74
      %p78 = scmp.eq.s32.totalorder %s17, 0
      %p79 = por %p77, %p78
      %p80 = scmp.ne.s32.totalorder %s72, %s74
      %p81 = scmp.eq.s32.totalorder %s22, 1
      %p82 = por %p80, %p81
      %p83 = scmp.ne.s32.totalorder %s74, %s75
      %p84 = scmp.eq.s32.totalorder %s22, 0
      %p85 = por %p83, %p84
      %p86 = scmp.ne.s32.totalorder %s74, %s75
      %p87 = scmp.eq.s32.totalorder %s23, 1
      %p88 = por %p86, %p87
      %p90 = scmp.ne.s32.totalorder %s75, %s89
      %p91 = scmp.eq.s32.totalorder %s23, 0
      %p92 = por %p90, %p91
      %s94 = sadd.s32 %s93, 1
      %p97 = scmp.eq.s32.totalorder %s17, 1
      %p98 = scmp.ne.s32.totalorder %s93, %s95
      %p99 = scmp.eq.s32.totalorder %s17, 0
      %p100 = por %p98, %p99
      %p101 = scmp.ne.s32.totalorder %s93, %s95
      %p102 = scmp.eq.s32.totalorder %s22, 1
      %p103 = por %p101, %p102
      %p104 = scmp.ne.s32.totalorder %s95, %s96
      %p105 = scmp.eq.s32.totalorder %s22, 0
      %p106 = por %p104, %p105
      %p107 = scmp.ne.s32.totalorder %s95, %s96
      %p108 = scmp.eq.s32.totalorder %s23, 1
      %p109 = por %p107, %p108
      %p111 = scmp.ne.s32.totalorder %s96, %s110
      %p112 = scmp.eq.s32.totalorder %s23, 0
      %p113 = por %p111, %p112
      %s115 = sadd.s32 %s114, 1
      %p118 = scmp.eq.s32.totalorder %s17, 1
      %p119 = scmp.ne.s32.totalorder %s114, %s116
      %p120 = scmp.eq.s32.totalorder %s17, 0
      %p121 = por %p119, %p120
      %p122 = scmp.ne.s32.totalorder %s114, %s116
      %p123 = scmp.eq.s32.totalorder %s22, 1
      %p124 = por %p122, %p123
      %p125 = scmp.ne.s32.totalorder %s116, %s117
      %p126 = scmp.eq.s32.totalorder %s22, 0
      %p127 = por %p125, %p126
      %p128 = scmp.ne.s32.totalorder %s116, %s117
      %p129 = scmp.eq.s32.totalorder %s23, 1
      %p130 = por %p128, %p129
      %p132 = scmp.ne.s32.totalorder %s117, %s131
      %p133 = scmp.eq.s32.totalorder %s23, 0
      %p134 = por %p132, %p133
      %s136 = sadd.s32 %s135, 1
      %p139 = scmp.eq.s32.totalorder %s17, 1
      %p140 = scmp.ne.s32.totalorder %s135, %s137
      %p141 = scmp.eq.s32.totalorder %s17, 0
      %p142 = por %p140, %p141
      %p143 = scmp.ne.s32.totalorder %s135, %s137
      %p144 = scmp.eq.s32.totalorder %s22, 1
      %p145 = por %p143, %p144
      %p146 = scmp.ne.s32.totalorder %s137, %s138
      %p147 = scmp.eq.s32.totalorder %s22, 0
      %p148 = por %p146, %p147
      %p149 = scmp.ne.s32.totalorder %s137, %s138
      %p150 = scmp.eq.s32.totalorder %s23, 1
      %p151 = por %p149, %p150
      %p153 = scmp.ne.s32.totalorder %s138, %s152
      %p154 = scmp.eq.s32.totalorder %s23, 0
      %p155 = por %p153, %p154
      %s156 = ssub.s32 %s17, %s24
      %p157 = scmp.eq.s32.totalorder %s156, 0
      %s159 = sadd.s32 %s158, 1
      %s160 = scalar_select %p157, %s158, %s159
      %p163 = pneg %p157
      %p164 = scmp.eq.s32.totalorder %s17, 1
      %p165 = por %p163, %p164
      %p166 = scmp.ne.s32.totalorder %s158, %s161
      %p167 = scmp.eq.s32.totalorder %s17, 0
      %p168 = por %p166, %p167
      %p169 = scmp.ne.s32.totalorder %s158, %s161
      %p170 = scmp.eq.s32.totalorder %s22, 1
      %p171 = por %p169, %p170
      %p172 = scmp.ne.s32.totalorder %s161, %s162
      %p173 = scmp.eq.s32.totalorder %s22, 0
      %p174 = por %p172, %p173
      %p175 = scmp.ne.s32.totalorder %s161, %s162
      %p176 = scmp.eq.s32.totalorder %s23, 1
      %p177 = por %p175, %p176
      %p179 = scmp.ne.s32.totalorder %s162, %s178
      %p180 = scmp.eq.s32.totalorder %s23, 0
      %p181 = por %p179, %p180
      %p182 = scmp.le.s32.totalorder 1, %s17
      %p183 = scmp.lt.s32.totalorder %s17, 3
      %p184 = pnand %p182, %p183
      %p185 = pneg %p184
      // Predicated region
      $region9: #{tpu_custom_call.1} parent=5 // pred_check
        _
      $region10: #{tpu_custom_call.1} parent=5 // pred_check_branch
        %187 = sbr.rel (%p184) target = $region12
      $region11: #{tpu_custom_call.1} parent=5 // pred_region
        %s188 = ssub.s32 %s17, 1
        // Predicated region
        $region13: #{tpu_custom_call.1} parent=11 // pred_check
          %p189 = pneg %p64
        $region14: #{tpu_custom_call.1} parent=11 // pred_check_branch
          %191 = sbr.rel (%p189) target = $region16
        $region15: #{tpu_custom_call.1} parent=11 // pred_region
          _
        $region16: #{tpu_custom_call.1} parent=11 // pred_fallthru
          _
        // Predicated region
        $region17: #{tpu_custom_call.1} parent=11 // pred_check
          %p192 = pneg %p85
        $region18: #{tpu_custom_call.1} parent=11 // pred_check_branch
          %194 = sbr.rel (%p192) target = $region20
        $region19: #{tpu_custom_call.1} parent=11 // pred_region
          _
        $region20: #{tpu_custom_call.1} parent=11 // pred_fallthru
          _
        // Predicated region
        $region21: #{tpu_custom_call.1} parent=11 // pred_check
          %p195 = pneg %p106
        $region22: #{tpu_custom_call.1} parent=11 // pred_check_branch
          %197 = sbr.rel (%p195) target = $region24
        $region23: #{tpu_custom_call.1} parent=11 // pred_region
          %s199 = ssub.s32 128, 128
          %200 = vsyncadd [#allocation3], %s199
          %s202 = sshll.u32 [#allocation2], 4
          %s203 = int_to_ptr.vmem [resolvable:$true] %s202
          %205 = dma.hbm_to_vmem [thread:$0]  %s3, 128, %s203, [#allocation3]
        $region24: #{tpu_custom_call.1} parent=11 // pred_fallthru
          _
        // Predicated region
        $region25: #{tpu_custom_call.1} parent=11 // pred_check
          %p206 = pneg %p127
        $region26: #{tpu_custom_call.1} parent=11 // pred_check_branch
          %208 = sbr.rel (%p206) target = $region28
        $region27: #{tpu_custom_call.1} parent=11 // pred_region
          %s210 = ssub.s32 128, 128
          %211 = vsyncadd [#allocation6], %s210
          %s213 = sshll.u32 [#allocation5], 4
          %s214 = int_to_ptr.vmem [resolvable:$true] %s213
          %216 = dma.hbm_to_vmem [thread:$0]  %s4, 128, %s214, [#allocation6]
        $region28: #{tpu_custom_call.1} parent=11 // pred_fallthru
          _
        // Predicated region
        $region29: #{tpu_custom_call.1} parent=11 // pred_check
          %p217 = pneg %p148
        $region30: #{tpu_custom_call.1} parent=11 // pred_check_branch
          %219 = sbr.rel (%p217) target = $region32
        $region31: #{tpu_custom_call.1} parent=11 // pred_region
          _
        $region32: #{tpu_custom_call.1} parent=11 // pred_fallthru
          _
      $region12: #{tpu_custom_call.1} parent=5 // pred_fallthru
        _
      %p220 = scmp.lt.s32.totalorder %s17, 2
      // Predicated region
      $region33: #{tpu_custom_call.1} parent=5 // pred_check
        %p221 = pneg %p220
      $region34: #{tpu_custom_call.1} parent=5 // pred_check_branch
        %223 = sbr.rel (%p221) target = $region36
      $region35: #{tpu_custom_call.1} parent=5 // pred_region
        // Predicated region
        $region37: #{tpu_custom_call.1} parent=35 // pred_check
          %p224 = pneg %p37
        $region38: #{tpu_custom_call.1} parent=35 // pred_check_branch
          %226 = sbr.rel (%p224) target = $region40
        $region39: #{tpu_custom_call.1} parent=35 // pred_region
          %p227 = scmp.lt.s32.totalorder %s17, 1
          %s228 = scalar_select %p227, %s17, 1
          %s229 = smul.addr %s228, 8
          %s230 = scalar_lea.vmem %s0, %s229
        $region40: #{tpu_custom_call.1} parent=35 // pred_fallthru
          _
      $region36: #{tpu_custom_call.1} parent=5 // pred_fallthru
        _
      %p231 = scmp.le.s32.totalorder 1, %s17
      %p232 = scmp.lt.s32.totalorder %s17, 3
      %p233 = pnand %p231, %p232
      %p234 = pneg %p233
      // Predicated region
      $region41: #{tpu_custom_call.1} parent=5 // pred_check
        _
      $region42: #{tpu_custom_call.1} parent=5 // pred_check_branch
        %236 = sbr.rel (%p233) target = $region44
      $region43: #{tpu_custom_call.1} parent=5 // pred_region
        %s237 = ssub.s32 %s17, 1
        // Predicated region
        $region45: #{tpu_custom_call.1} parent=43 // pred_check
          %p238 = pneg %p106
        $region46: #{tpu_custom_call.1} parent=43 // pred_check_branch
          %240 = sbr.rel (%p238) target = $region48
        $region47: #{tpu_custom_call.1} parent=43 // pred_region
          %241 = dma.done [#allocation3], 128
        $region48: #{tpu_custom_call.1} parent=43 // pred_fallthru
          _
        // Predicated region
        $region49: #{tpu_custom_call.1} parent=43 // pred_check
          %p242 = pneg %p127
        $region50: #{tpu_custom_call.1} parent=43 // pred_check_branch
          %244 = sbr.rel (%p242) target = $region52
        $region51: #{tpu_custom_call.1} parent=43 // pred_region
          %245 = dma.done [#allocation6], 128
        $region52: #{tpu_custom_call.1} parent=43 // pred_fallthru
          _
        %p246 = scmp.lt.s32.totalorder %s22, 1
        %s247 = scalar_select %p246, %s22, 1
        %s248 = smul.addr %s247, 8
        %s249 = scalar_lea.vmem %s0, %s248
        %p250 = pneg %p43
        %p251 = pneg %p40
        %p252 = pneg %p64
        %p253 = pneg %p61
        %p254 = pneg %p85
        %p255 = pneg %p82
        %p256 = pneg %p106
        %p257 = pneg %p103
        %p258 = pneg %p127
        %p259 = pneg %p124
        %p260 = pneg %p148
        %p261 = pneg %p145
        %p262 = pneg %p174
        %p263 = pneg %p171
        %s264 = sand.u32 %s161, 1
        %s265 = scalar_lea.sflag [#allocation4], %s264
        %s266 = sand.u32 %s161, 1
        %s267 = smul.addr %s266, 8
        %s268 = scalar_lea.vmem [#allocation7], %s267
        %p269 = scmp.lt.s32.totalorder %s22, 1
        %s270 = scalar_select %p269, %s22, 1
        %s271 = smul.addr %s270, 8
        %s272 = scalar_lea.vmem %s0, %s271
        %v273 = vld [vmem:[%s1] sm:$0xff]
        %v274 = vld [vmem:[%s1 + $0x8] sm:$0xff]
        %v275 = vld [vmem:[%s2] sm:$0xff]
        %v276 = vld [vmem:[#allocation2] sm:$0xff]
        %v277 = vld [vmem:[#allocation5] sm:$0xff]
        %v278 = vld [vmem:[%s5] sm:$0x1]
        %v279 = vld [vmem:[%s272] sm:$0xff]
        %vm280 = vcmask 64512
        %v282 = vsel %vm280, %v273, 0
        %v285 = vsel %vm280, %v274, 0
        %287 = vmatprep.subr.mxu0 0.0
        %288 = vmatpush1.msra.mxu0 0.0
        %289 = vmatprep.subr.mxu0 0.0
        %290 = vmatpush1.msra.mxu0 0.0
        %291 = vmatprep.subr.mxu0 0.0
        %292 = vmatpush1.msra.mxu0 0.0
        %293 = vmatprep.subr.mxu0 0.0
        %294 = vmatpush1.msra.mxu0 0.0
        %295 = vmatprep.subr.mxu0 0.0
        %296 = vmatpush1.msra.mxu0 0.0
        %297 = vmatprep.subr.mxu0 0.0
        %298 = vmatpush1.msra.mxu0 0.0
        %299 = vmatprep.subr.mxu0 0.0
        %300 = vmatpush1.msra.mxu0 0.0
        %301 = vmatprep.subr.mxu0 0.0
        %302 = vmatpush1.msra.mxu0 0.0
        %303 = vmatprep.subr.mxu0 0.0
        %304 = vmatpush1.msra.mxu0 0.0
        %305 = vmatprep.subr.mxu0 0.0
        %306 = vmatpush1.msra.mxu0 0.0
        %307 = vmatprep.subr.mxu0 0.0
        %308 = vmatpush1.msra.mxu0 0.0
        %309 = vmatprep.subr.mxu0 0.0
        %310 = vmatpush1.msra.mxu0 0.0
        %311 = vmatprep.subr.mxu0 0.0
        %312 = vmatpush1.msra.mxu0 0.0
        %313 = vmatprep.subr.mxu0 0.0
        %314 = vmatpush1.msra.mxu0 0.0
        %315 = vmatprep.subr.mxu0 0.0
        %316 = vmatpush1.msra.mxu0 0.0
        %317 = vmatprep.subr.mxu0 0.0
        %318 = vmatpush1.msra.mxu0 %v279
        %319 = vmatprep.subr.mxu0 0.0
        %320 = vmatpush2.msra.mxu0 0.0
        %321 = vmatprep.subr.mxu0 0.0
        %322 = vmatpush2.msra.mxu0 0.0
        %323 = vmatprep.subr.mxu0 0.0
        %324 = vmatpush2.msra.mxu0 0.0
        %325 = vmatprep.subr.mxu0 0.0
        %326 = vmatpush2.msra.mxu0 0.0
        %327 = vmatprep.subr.mxu0 0.0
        %328 = vmatpush2.msra.mxu0 0.0
        %329 = vmatprep.subr.mxu0 0.0
        %330 = vmatpush2.msra.mxu0 0.0
        %331 = vmatprep.subr.mxu0 0.0
        %332 = vmatpush2.msra.mxu0 0.0
        %333 = vmatprep.subr.mxu0 0.0
        %334 = vmatpush2.msra.mxu0 0.0
        %335 = vmatprep.subr.mxu0 0.0
        %336 = vmatpush2.msra.mxu0 0.0
        %337 = vmatprep.subr.mxu0 0.0
        %338 = vmatpush2.msra.mxu0 0.0
        %339 = vmatprep.subr.mxu0 0.0
        %340 = vmatpush2.msra.mxu0 0.0
        %341 = vmatprep.subr.mxu0 0.0
        %342 = vmatpush2.msra.mxu0 0.0
        %343 = vmatprep.subr.mxu0 0.0
        %344 = vmatpush2.msra.mxu0 0.0
        %345 = vmatprep.subr.mxu0 0.0
        %346 = vmatpush2.msra.mxu0 0.0
        %347 = vmatprep.subr.mxu0 0.0
        %348 = vmatpush2.msra.mxu0 0.0
        %349 = vmatprep.subr.mxu0 0.0
        %350 = vmatpush2.msra.mxu0 0.0
        %351 = vmatprep.mubr.f32.mxu0 0.0
        %352 = vmatmul.mubr.f32.gmra.mxu0 %v282
        %v353 = vpop.f32.mrf.mxu0
        %v354 = vadd.f32 0.0, %v353
        %v355 = vpop.f32.mrf.mxu0
        %356 = vmatprep.mubr.f32.mxu0 0.0
        %357 = vmatmul.mubr.f32.gmra.mxu0 %v285
        %v358 = vpop.f32.mrf.mxu0
        %v359 = vadd.f32 0.0, %v358
        %v360 = vpop.f32.mrf.mxu0
        %361 = vdwg.mxu0
        %v362 = vmul.f32 %v354, %v276
        %v363 = vmul.f32 %v359, %v277
        %v364 = vsub.f32 %v362, %v363
        %v365 = vmul.f32 %v354, %v277
        %v366 = vmul.f32 %v359, %v276
        %v367 = vadd.f32 %v365, %v366
        %v369 = vlaneseq
        %v370 = vshrl.u32 %v369, 7
        %v371 = vsub.s32 0, %v370
        %v372 = vrot.slane %v278, %v371
        %vm374 = vcmask 130048
        %v376 = vsel %vm374, %v275, 0
        %378 = vmatprep.subr.mxu0 0.0
        %379 = vmatpush1.msra.mxu0 0.0
        %380 = vmatprep.subr.mxu0 0.0
        %381 = vmatpush1.msra.mxu0 0.0
        %382 = vmatprep.subr.mxu0 0.0
        %383 = vmatpush1.msra.mxu0 0.0
        %384 = vmatprep.subr.mxu0 0.0
        %385 = vmatpush1.msra.mxu0 0.0
        %386 = vmatprep.subr.mxu0 0.0
        %387 = vmatpush1.msra.mxu0 0.0
        %388 = vmatprep.subr.mxu0 0.0
        %389 = vmatpush1.msra.mxu0 0.0
        %390 = vmatprep.subr.mxu0 0.0
        %391 = vmatpush1.msra.mxu0 0.0
        %392 = vmatprep.subr.mxu0 0.0
        %393 = vmatpush1.msra.mxu0 0.0
        %394 = vmatprep.subr.mxu0 0.0
        %395 = vmatpush1.msra.mxu0 0.0
        %396 = vmatprep.subr.mxu0 0.0
        %397 = vmatpush1.msra.mxu0 0.0
        %398 = vmatprep.subr.mxu0 0.0
        %399 = vmatpush1.msra.mxu0 0.0
        %400 = vmatprep.subr.mxu0 0.0
        %401 = vmatpush1.msra.mxu0 0.0
        %402 = vmatprep.subr.mxu0 0.0
        %403 = vmatpush1.msra.mxu0 0.0
        %404 = vmatprep.subr.mxu0 0.0
        %405 = vmatpush1.msra.mxu0 0.0
        %406 = vmatprep.subr.mxu0 0.0
        %407 = vmatpush1.msra.mxu0 %v367
        %408 = vmatprep.subr.mxu0 0.0
        %409 = vmatpush1.msra.mxu0 %v364
        %410 = vmatprep.subr.mxu0 0.0
        %411 = vmatpush2.msra.mxu0 0.0
        %412 = vmatprep.subr.mxu0 0.0
        %413 = vmatpush2.msra.mxu0 0.0
        %414 = vmatprep.subr.mxu0 0.0
        %415 = vmatpush2.msra.mxu0 0.0
        %416 = vmatprep.subr.mxu0 0.0
        %417 = vmatpush2.msra.mxu0 0.0
        %418 = vmatprep.subr.mxu0 0.0
        %419 = vmatpush2.msra.mxu0 0.0
        %420 = vmatprep.subr.mxu0 0.0
        %421 = vmatpush2.msra.mxu0 0.0
        %422 = vmatprep.subr.mxu0 0.0
        %423 = vmatpush2.msra.mxu0 0.0
        %424 = vmatprep.subr.mxu0 0.0
        %425 = vmatpush2.msra.mxu0 0.0
        %426 = vmatprep.subr.mxu0 0.0
        %427 = vmatpush2.msra.mxu0 0.0
        %428 = vmatprep.subr.mxu0 0.0
        %429 = vmatpush2.msra.mxu0 0.0
        %430 = vmatprep.subr.mxu0 0.0
        %431 = vmatpush2.msra.mxu0 0.0
        %432 = vmatprep.subr.mxu0 0.0
        %433 = vmatpush2.msra.mxu0 0.0
        %434 = vmatprep.subr.mxu0 0.0
        %435 = vmatpush2.msra.mxu0 0.0
        %436 = vmatprep.subr.mxu0 0.0
        %437 = vmatpush2.msra.mxu0 0.0
        %438 = vmatprep.subr.mxu0 0.0
        %439 = vmatpush2.msra.mxu0 0.0
        %440 = vmatprep.subr.mxu0 0.0
        %441 = vmatpush2.msra.mxu0 0.0
        %442 = vmatprep.mubr.f32.mxu0 0.0
        %443 = vmatmul.mubr.f32.gmra.mxu0 %v376
        %v444 = vpop.f32.mrf.mxu0
        %v445 = vadd.f32 %v372, %v444
        %v446 = vpop.f32.mrf.mxu0
        %447 = vdwg.mxu0
        %vm448 = vcmask 261120
        %449 = vst.msk [vmem:[%s268] sm:$0xff] %vm448, %v445
        %s450 = sand.u32 %s161, 1
        %s451 = scalar_lea.sflag [#allocation4], %s450
        %s452 = sand.u32 %s161, 1
        %s453 = smul.addr %s452, 8
        %s454 = scalar_lea.vmem [#allocation7], %s453
        // Predicated region
        $region53: #{tpu_custom_call.1} parent=43 // pred_check
          %p455 = pneg %p171
        $region54: #{tpu_custom_call.1} parent=43 // pred_check_branch
          %457 = sbr.rel (%p455) target = $region56
        $region55: #{tpu_custom_call.1} parent=43 // pred_region
          %s459 = ssub.s32 128, 128
          %460 = vsyncadd %s451, %s459
          %s461 = smul.addr %s22, 128
          %s462 = scalar_lea.hbm %s6, %s461
          %s464 = sshll.u32 %s454, 4
          %s465 = int_to_ptr.vmem [resolvable:$true] %s464
          %467 = dma.vmem_to_hbm [thread:$0]  %s465, 128, %s462, %s451
        $region56: #{tpu_custom_call.1} parent=43 // pred_fallthru
          _
      $region44: #{tpu_custom_call.1} parent=5 // pred_fallthru
        _
      %p468 = scmp.le.s32.totalorder 2, %s17
      // Predicated region
      $region57: #{tpu_custom_call.1} parent=5 // pred_check
        %p469 = pneg %p468
      $region58: #{tpu_custom_call.1} parent=5 // pred_check_branch
        %471 = sbr.rel (%p469) target = $region60
      $region59: #{tpu_custom_call.1} parent=5 // pred_region
        %s472 = ssub.s32 %s17, 2
        // Predicated region
        $region61: #{tpu_custom_call.1} parent=59 // pred_check
          %p473 = pneg %p177
        $region62: #{tpu_custom_call.1} parent=59 // pred_check_branch
          %475 = sbr.rel (%p473) target = $region64
        $region63: #{tpu_custom_call.1} parent=59 // pred_region
          %s476 = sand.u32 %s162, 1
          %s477 = scalar_lea.sflag [#allocation4], %s476
          %s478 = sand.u32 %s162, 1
          %s479 = smul.addr %s478, 8
          %s480 = scalar_lea.vmem [#allocation7], %s479
          %481 = dma.done %s477, 128
        $region64: #{tpu_custom_call.1} parent=59 // pred_fallthru
          _
      $region60: #{tpu_custom_call.1} parent=5 // pred_fallthru
        _
    $region6: #{tpu_custom_call.1} parent=1 // loop_footer
      %s21 = sadd.s32 1, %s17
    $region7: #{tpu_custom_call.1} parent=1 // loop_footer_branch
      %16 = sbr.rel target = $region3
    $region8: #{tpu_custom_call.1} parent=1 // loop_exit
      _
    %482 = vsyncpa [#allocation3], 1
    %s483 = scalar_lea.sflag [#allocation3], 1
    %484 = vsyncpa %s483, 1
    %485 = vsyncpa [#allocation6], 1
    %486 = vsyncpa [#allocation4], 1
    %s487 = scalar_lea.sflag [#allocation4], 1
    %488 = vsyncpa %s487, 1

</llo_original>
